<compile_context>
chip_gen: v6e
topology: v6e:2x2x1
jax: 0.10.0
libtpu: 0.0.40
codegen_flags: <defaults>
</compile_context>

<pallas_src>
import functools

import jax
import jax.numpy as jnp
from jax.experimental import pallas as pl
from jax.experimental.pallas import tpu as pltpu


# ----------------------------------------------------------------------------
# Pallas kernel: batch-tiled CLS projection + fused bias
# ----------------------------------------------------------------------------
def cls_head_kernel(cls_ref, w_ref, b_ref, out_ref):
    # cls_ref: [TB, H]   bf16  (CLS activations for one batch tile)
    # w_ref:   [H, 128]  bf16  (pre-transposed, zero-padded Linear weight)
    # b_ref:   [1, 128]  f32   (zero-padded bias, resident across tiles)
    # out_ref: [TB, 128] f32   (lane-dense output -> unmasked stores)
    out_ref[...] = (
        jnp.dot(cls_ref[...], w_ref[...], preferred_element_type=jnp.float32)
        + b_ref[...]
    )


def _pick_batch_tile(B, tb):
    """Sublane-aligned batch tile; prefer >=2 grid steps for megacore/v7x."""
    tb = max(8, (tb // 8) * 8)
    if B <= tb:
        # Split a single-tile batch into two parallel grid steps when both
        # halves stay multiples of 8 (keeps bf16 sublane packing aligned).
        if B >= 16 and B % 16 == 0:
            return B // 2
        return B              # full-dim block (allowed by the (8,128) rule)
    return tb


def seq_classification_head(cls_bf16, w_packed, b_packed, *, out_dim=64, tb=1024):
    """cls_bf16: [B, H] bf16; w_packed: [H, 128] bf16; b_packed: [1, 128] f32."""
    B, H = cls_bf16.shape
    n_pad = w_packed.shape[1]                      # 128 (lane-padded head width)

    TB = _pick_batch_tile(B, tb)
    grid = (pl.cdiv(B, TB),)

    proj = pl.pallas_call(
        cls_head_kernel,
        out_shape=jax.ShapeDtypeStruct((B, n_pad), jnp.float32),
        grid=grid,
        in_specs=[
            pl.BlockSpec((TB, H), lambda i: (i, 0)),        # batch-tiled activations
            pl.BlockSpec((H, n_pad), lambda i: (0, 0)),     # weight resident across tiles
            pl.BlockSpec((1, n_pad), lambda i: (0, 0)),     # bias resident across tiles
        ],
        out_specs=pl.BlockSpec((TB, n_pad), lambda i: (i, 0)),
        compiler_params=pltpu.CompilerParams(
            dimension_semantics=("parallel",),              # megacore-shardable batch axis
            vmem_limit_bytes=32 * 1024 * 1024,              # headroom for big tiles on v5e
        ),
    )(cls_bf16, w_packed, b_packed)

    # Un-pad back to the real 64-wide head.  The padded weight/bias lanes are
    # zero, and this slice guarantees they never leak downstream.
    return proj[:, :out_dim]


# ----------------------------------------------------------------------------
# Whole forward (encoder stand-in + head) under one jit so the CLS slice,
# mask and bf16 cast fuse into the producing fusion — only [B, H] bf16
# crosses into the Pallas kernel.
# ----------------------------------------------------------------------------
@functools.partial(jax.jit, static_argnames=("out_dim", "tb"))
def seq_classification_forward(input_ids, attn_masks, token_type_ids,
                               tok_emb, typ_emb, w_packed, b_packed,
                               *, out_dim=64, tb=1024):
    # CLS-only synthetic encoder path: slice token ids BEFORE embedding/mask
    # so the other S-1 positions are never touched on the head's hot path.
    cls = tok_emb[input_ids[:, 0]] + typ_emb[token_type_ids[:, 0]]        # [B, H]
    cls = cls * attn_masks[:, 0:1].astype(cls.dtype)
    cls_bf16 = cls.astype(jnp.bfloat16)                                   # fused under jit
    return seq_classification_head(cls_bf16, w_packed, b_packed,
                                   out_dim=out_dim, tb=tb)


# ----------------------------------------------------------------------------
# Glue: deterministic synthetic stand-in for the pretrained BERT encoder.
# TODO(synk): the real module uses AutoModel.from_pretrained(args.bert_model);
#             a full pretrained transformer has no in-script Pallas equivalent,
#             so we produce `last_hidden_state` from deterministic embeddings.
# ----------------------------------------------------------------------------
def make_synthetic_bert_params(vocab_size, hid_dim, key):
    k_tok, k_typ = jax.random.split(key)
    tok_emb = jax.random.normal(k_tok, (vocab_size, hid_dim), jnp.float32) * 0.02
    typ_emb = jax.random.normal(k_typ, (2, hid_dim), jnp.float32) * 0.02
    return tok_emb, typ_emb


def synthetic_bert_last_hidden_state(input_ids, token_type_ids, attn_masks,
                                     tok_emb, typ_emb):
    # Full [B, S, H] output (reference-check only; the jitted forward uses the
    # CLS-only path which is mathematically identical at position 0).
    hidden = tok_emb[input_ids] + typ_emb[token_type_ids]
    hidden = hidden * attn_masks[..., None].astype(jnp.float32)
    return hidden


class SeqClassificationPallas:
    """Mirrors Seq_Classification.forward: bert -> [:, 0] -> Linear(hid_dim, 64)."""

    OUT_DIM = 64
    LANE_PAD = 128   # pad head width to a full 128-lane vreg row

    def __init__(self, hid_dim, vocab_size, key):
        self.hid_dim = hid_dim
        self.vocab_size = vocab_size
        k_bert, k_w, k_b = jax.random.split(key, 3)
        self.tok_emb, self.typ_emb = make_synthetic_bert_params(
            vocab_size, hid_dim, k_bert)

        # nn.Linear(hid_dim, 64): weight [64, hid_dim], bias [64]
        bound = 1.0 / (hid_dim ** 0.5)
        self.weight = jax.random.uniform(k_w, (self.OUT_DIM, hid_dim),
                                         jnp.float32, -bound, bound)
        self.bias = jax.random.uniform(k_b, (self.OUT_DIM,), jnp.float32,
                                       -bound, bound)

        # Precompute once: transpose -> [H, 64], zero-pad output dim to 128
        # lanes, cast to bf16 for the MXU operands.  Bias is zero-padded to
        # (1, 128) f32 so it can be fused into the kernel.
        pad = self.LANE_PAD - self.OUT_DIM
        self.w_packed = jnp.pad(self.weight.T, ((0, 0), (0, pad))
                                ).astype(jnp.bfloat16)                 # [H, 128]
        self.b_packed = jnp.pad(self.bias, (0, pad))[None, :]          # [1, 128] f32

    def forward(self, x_input_ids, x_attn_masks, x_token_type_ids):
        return seq_classification_forward(
            x_input_ids, x_attn_masks, x_token_type_ids,
            self.tok_emb, self.typ_emb, self.w_packed, self.b_packed,
            out_dim=self.OUT_DIM, tb=1024)


if __name__ == "__main__":
    key = jax.random.PRNGKey(0)
    k_params, k_ids = jax.random.split(key)

    B, S, H, V = 2, 8, 32, 100   # small shapes (real BERT-base: H=768, S=512)

    model = SeqClassificationPallas(hid_dim=H, vocab_size=V, key=k_params)

    x_input_ids = jax.random.randint(k_ids, (B, S), 0, V, dtype=jnp.int32)
    x_attn_masks = jnp.ones((B, S), dtype=jnp.int32)
    x_token_type_ids = jnp.zeros((B, S), dtype=jnp.int32)

    out = model.forward(x_input_ids, x_attn_masks, x_token_type_ids)
    out = jax.block_until_ready(out)

    # Reference check in plain JAX (f32), built from the full [B, S, H] hidden
    # state exactly as the PyTorch spec does; tolerance accounts for bf16
    # MXU operands (accumulation stays f32).
    last_hidden = synthetic_bert_last_hidden_state(
        x_input_ids, x_token_type_ids, x_attn_masks,
        model.tok_emb, model.typ_emb)
    ref = last_hidden[:, 0] @ model.weight.T + model.bias
    assert out.shape == (B, 64)
    assert jnp.allclose(out, ref, atol=1e-2, rtol=1e-2), "mismatch vs reference"

    print("KERNEL_OK")
</pallas_src>

<mosaic_0001>
module attributes {stable_mosaic.version = 11 : i64} {
  func.func @cls_head_kernel(%arg0: i32, %arg1: memref<2x32xbf16, #tpu.memory_space<vmem>>, %arg2: memref<32x128xbf16, #tpu.memory_space<vmem>>, %arg3: memref<1x128xf32, #tpu.memory_space<vmem>>, %arg4: memref<2x128xf32, #tpu.memory_space<vmem>>) attributes {dimension_semantics = [#tpu.dimension_semantics<parallel>], iteration_bounds = array<i64: 1>, scalar_prefetch = 0 : i64, scratch_operands = 0 : i64, tpu.core_type = #tpu.core_type<tc>, window_params = [{transform_indices = @transform_0, window_bounds = array<i64: 2, 32>}, {pipeline_mode = #tpu.pipeline_mode<synchronous>, transform_indices = @transform_1, window_bounds = array<i64: 32, 128>}, {pipeline_mode = #tpu.pipeline_mode<synchronous>, transform_indices = @transform_2, window_bounds = array<i64: 1, 128>}, {transform_indices = @transform_3, window_bounds = array<i64: 2, 128>}]} {
    %c0 = arith.constant 0 : index
    %c0_0 = arith.constant 0 : index
    %0 = vector.load %arg1[%c0, %c0_0] : memref<2x32xbf16, #tpu.memory_space<vmem>>, vector<2x32xbf16>
    %c0_1 = arith.constant 0 : index
    %c0_2 = arith.constant 0 : index
    %1 = vector.load %arg2[%c0_1, %c0_2] : memref<32x128xbf16, #tpu.memory_space<vmem>>, vector<32x128xbf16>
    %cst = arith.constant dense<0.000000e+00> : vector<2x128xf32>
    %2 = tpu.matmul %0, %1, %cst {dimension_numbers = #tpu.dot_dimension_numbers<[1], [0], [0], [1], [0, 0, 1, 1], [], []>} : vector<2x32xbf16>, vector<32x128xbf16>, vector<2x128xf32> -> vector<2x128xf32>
    %c0_3 = arith.constant 0 : index
    %c0_4 = arith.constant 0 : index
    %3 = vector.load %arg3[%c0_3, %c0_4] : memref<1x128xf32, #tpu.memory_space<vmem>>, vector<1x128xf32>
    %4 = vector.broadcast %3 : vector<1x128xf32> to vector<2x128xf32>
    %5 = arith.addf %2, %4 : vector<2x128xf32>
    %c0_5 = arith.constant 0 : index
    %c0_6 = arith.constant 0 : index
    %6 = vector.load %arg4[%c0_5, %c0_6] : memref<2x128xf32, #tpu.memory_space<vmem>>, vector<2x128xf32>
    tpu.vector_store %arg4[%c0_5, %c0_6], %5 {strides = array<i32>} : memref<2x128xf32, #tpu.memory_space<vmem>>, vector<2x128xf32>,
    return
  }
  func.func @transform_0(%arg0: i32) -> (i32, i32) {
    %c0_i32 = arith.constant 0 : i32
    %c0_i32_0 = arith.constant 0 : i32
    return %arg0, %c0_i32 : i32, i32
  }
  func.func @transform_1(%arg0: i32) -> (i32, i32) {
    %c0_i32 = arith.constant 0 : i32
    %c0_i32_0 = arith.constant 0 : i32
    %c0_i32_1 = arith.constant 0 : i32
    return %c0_i32, %c0_i32_0 : i32, i32
  }
  func.func @transform_2(%arg0: i32) -> (i32, i32) {
    %c0_i32 = arith.constant 0 : i32
    %c0_i32_0 = arith.constant 0 : i32
    %c0_i32_1 = arith.constant 0 : i32
    return %c0_i32, %c0_i32_0 : i32, i32
  }
  func.func @transform_3(%arg0: i32) -> (i32, i32) {
    %c0_i32 = arith.constant 0 : i32
    %c0_i32_0 = arith.constant 0 : i32
    return %arg0, %c0_i32 : i32, i32
  }
}

</mosaic_0001>

<llo_original>
// kernel: seq_classification_forward.1
$region0: #{seq_classification_forward.1}
  #allocation0 [shape = 'u32[]', space=smem, size = 0x4, offset = 0x4, fixed_abs, tag = 'smem constant byte address 0x4 - core index']
  #allocation1 [shape = 'u32[144,128]{1,0:T(1,128)}', space=vmem, size = 0x12000, scoped, tag = 'internal scratch']
  %s0 = inlined_call_operand.vmem [shape: bf16[2,32], index: 0, kind: input, shape index: {}]
  %s1 = inlined_call_operand.vmem [shape: bf16[32,128], index: 1, kind: input, shape index: {}]
  %s2 = inlined_call_operand.vmem [shape: f32[1,128], index: 2, kind: input, shape index: {}]
  %s3 = inlined_call_operand.hbm [shape: f32[2,128], index: 3, kind: output, shape index: {}]
  %s4 = sld [smem:[#allocation0]]
  $region22: #{seq_classification_forward.1} parent=0
    _
  %s6 = ssub.s32 1, %s4
  %s7 = scalar_select 0, %s6, %s4
  $region1: #{seq_classification_forward.1} parent=0
    #allocation2 [shape = 'u8[1024]{0}', space=vmem, size = 0x400, scoped, tag = 'output window, operand 0, single buffered']
    #allocation3 [shape = 's32[1]{0}', space=sflag, size = 0x4, scoped, tag = 'scoped memory for seq_classification_forward.1']
    %8 = vsyncpa [#allocation3], 0
    // Predicated region
    $region2: #{seq_classification_forward.1} parent=1 // pred_check
      _
    $region3: #{seq_classification_forward.1} parent=1 // pred_check_branch
      %10 = sbr.rel (0) target = $region5
    $region4: #{seq_classification_forward.1} parent=1 // pred_region
      _
    $region5: #{seq_classification_forward.1} parent=1 // pred_fallthru
      _
    // Predicated region
    $region6: #{seq_classification_forward.1} parent=1 // pred_check
      _
    $region7: #{seq_classification_forward.1} parent=1 // pred_check_branch
      %12 = sbr.rel (0) target = $region9
    $region8: #{seq_classification_forward.1} parent=1 // pred_region
      _
    $region9: #{seq_classification_forward.1} parent=1 // pred_fallthru
      _
    // Predicated region
    $region10: #{seq_classification_forward.1} parent=1 // pred_check
      _
    $region11: #{seq_classification_forward.1} parent=1 // pred_check_branch
      %14 = sbr.rel (0) target = $region13
    $region12: #{seq_classification_forward.1} parent=1 // pred_region
      _
    $region13: #{seq_classification_forward.1} parent=1 // pred_fallthru
      _
    %v16 = vld [vmem:[%s0] sm:$0x1]
    %v17 = vld [vmem:[%s1] sm:$0xf]
    %v18 = vld [vmem:[%s1 + $0x4] sm:$0xf]
    %v19 = vld [vmem:[%s1 + $0x8] sm:$0xf]
    %v20 = vld [vmem:[%s1 + $0xc] sm:$0xf]
    %v21 = vld [vmem:[%s2] sm:$0x1]
    %v23 = vlaneseq
    %v24 = vshrl.u32 %v23, 7
    %v25 = vsub.s32 0, %v24
    %v26 = vrot.slane %v21, %v25
    %v32 = vunpack.c.l.b16 %v17
    %v33 = vunpack.c.l.b16 %v18
    %v34 = vunpack.c.l.b16 %v19
    %v35 = vunpack.c.l.b16 %v20
    %v36 = vpack.c.b16 %v33, %v32
    %v37 = vpack.c.b16 %v35, %v34
    %vm40 = vcmask 261120
    %v42 = vsel %vm40, %v16, 0
    %44 = vmatprep.subr.bf16.mxu0 0
    %45 = vmatpush1.bf16.msra.mxu0 0
    %46 = vmatprep.subr.bf16.mxu0 0
    %47 = vmatpush1.bf16.msra.mxu0 0
    %48 = vmatprep.subr.bf16.mxu0 0
    %49 = vmatpush1.bf16.msra.mxu0 0
    %50 = vmatprep.subr.bf16.mxu0 0
    %51 = vmatpush1.bf16.msra.mxu0 0
    %52 = vmatprep.subr.bf16.mxu0 0
    %53 = vmatpush1.bf16.msra.mxu0 0
    %54 = vmatprep.subr.bf16.mxu0 0
    %55 = vmatpush1.bf16.msra.mxu0 0
    %56 = vmatprep.subr.bf16.mxu0 0
    %57 = vmatpush1.bf16.msra.mxu0 %v37
    %58 = vmatprep.subr.bf16.mxu0 0
    %59 = vmatpush1.bf16.msra.mxu0 %v36
    %60 = vmatprep.subr.bf16.mxu0 0
    %61 = vmatpush2.bf16.msra.mxu0 0
    %62 = vmatprep.subr.bf16.mxu0 0
    %63 = vmatpush2.bf16.msra.mxu0 0
    %64 = vmatprep.subr.bf16.mxu0 0
    %65 = vmatpush2.bf16.msra.mxu0 0
    %66 = vmatprep.subr.bf16.mxu0 0
    %67 = vmatpush2.bf16.msra.mxu0 0
    %68 = vmatprep.subr.bf16.mxu0 0
    %69 = vmatpush2.bf16.msra.mxu0 0
    %70 = vmatprep.subr.bf16.mxu0 0
    %71 = vmatpush2.bf16.msra.mxu0 0
    %72 = vmatprep.subr.bf16.mxu0 0
    %73 = vmatpush2.bf16.msra.mxu0 0
    %74 = vmatprep.subr.bf16.mxu0 0
    %75 = vmatpush2.bf16.msra.mxu0 0
    %76 = vmatprep.mubr.bf16.mxu0 0
    %77 = vmatmul.mubr.bf16.gmra.mxu0 %v42
    %v78 = vpop.f32.mrf.mxu0
    %v79 = vadd.f32 %v26, %v78
    %v80 = vpop.f32.mrf.mxu0
    %v81 = vpop.f32.mrf.mxu0
    %v82 = vpop.f32.mrf.mxu0
    %83 = vdwg.mxu0
    %84 = vst [vmem:[#allocation2] sm:$0x3] %v79
    // Predicated region
    $region14: #{seq_classification_forward.1} parent=1 // pred_check
      _
    $region15: #{seq_classification_forward.1} parent=1 // pred_check_branch
      %86 = sbr.rel (0) target = $region17
    $region16: #{seq_classification_forward.1} parent=1 // pred_region
      %s88 = ssub.s32 32, 32
      %89 = vsyncadd [#allocation3], %s88
      %s91 = sshll.u32 [#allocation2], 4
      %s92 = int_to_ptr.vmem [resolvable:$true] %s91
      %94 = dma.vmem_to_hbm [thread:$0]  %s92, 32, %s3, [#allocation3]
    $region17: #{seq_classification_forward.1} parent=1 // pred_fallthru
      _
    // Predicated region
    $region18: #{seq_classification_forward.1} parent=1 // pred_check
      _
    $region19: #{seq_classification_forward.1} parent=1 // pred_check_branch
      %96 = sbr.rel (0) target = $region21
    $region20: #{seq_classification_forward.1} parent=1 // pred_region
      %97 = dma.done [#allocation3], 32
    $region21: #{seq_classification_forward.1} parent=1 // pred_fallthru
      _
    %98 = vsyncpa [#allocation3], 1

</llo_original>
